<compile_context>
chip_gen: v7x
topology: tpu7x:2x2x1
jax: 0.10.0
libtpu: 0.0.40
codegen_flags: <defaults>
</compile_context>

<pallas_src>
import jax
import jax.numpy as jnp
from jax.experimental import pallas as pl
from jax.experimental.pallas import tpu as pltpu

BN_EPS = 0.8  # nn.BatchNorm1d(out_feat, 0.8): second positional arg is eps.


def _leaky_relu(x, slope=0.2):
    return jnp.where(x > 0, x, slope * x)


def generator_tab_kernel(z_ref, w1_ref, b1_ref, w2_ref, bn_scale_ref,
                         bn_shift_ref, w3_ref, b3_ref, out_ref):
    # z tile: (TM, L) bf16. Weights: bf16, resident across grid steps.
    # Biases / BN scale-shift: (1, out) f32 rows (broadcast over rows).
    z = z_ref[...]

    # fc1 + LeakyReLU (f32 accumulate, f32 elementwise)
    h1 = jnp.dot(z, w1_ref[...], preferred_element_type=jnp.float32)
    h1 = _leaky_relu(h1 + b1_ref[...])

    # fc2 + (bias + eval BatchNorm folded into scale/shift) + LeakyReLU
    h2 = jnp.dot(h1.astype(jnp.bfloat16), w2_ref[...],
                 preferred_element_type=jnp.float32)
    h2 = _leaky_relu(h2 * bn_scale_ref[...] + bn_shift_ref[...])

    # fc3 + Tanh
    h3 = jnp.dot(h2.astype(jnp.bfloat16), w3_ref[...],
                 preferred_element_type=jnp.float32) + b3_ref[...]
    out_ref[...] = jnp.tanh(h3).astype(out_ref.dtype)


def generator_tab_forward(z, params, *, block_m=128):
    """z: (B, latent_dim) float32. Returns (B, img_shape) float32."""
    (w1, b1, w2, b2, gamma, beta, run_mean, run_var, w3, b3) = params
    b, latent = z.shape
    img_shape = w3.shape[1]

    # Fold fc2 bias + eval-mode BatchNorm into one per-feature scale/shift:
    #   y = gamma * (x@W2 + b2 - mean) / sqrt(var + eps) + beta
    #     = (x@W2) * bn_scale + bn_shift
    inv_std = jax.lax.rsqrt(run_var + BN_EPS)
    bn_scale = (gamma * inv_std).astype(jnp.float32)                # (1, 2L)
    bn_shift = (beta + (b2 - run_mean) * gamma * inv_std).astype(jnp.float32)

    # bf16 storage for MXU operands (halves dominant weight DMA).
    z_bf = z.astype(jnp.bfloat16)
    w1b = w1.astype(jnp.bfloat16)
    w2b = w2.astype(jnp.bfloat16)
    w3b = w3.astype(jnp.bfloat16)

    tm = block_m if (b % block_m == 0) else b
    grid = (b // tm,)

    # Constant index_map -> block stays resident across all grid steps.
    def resident(a):
        return pl.BlockSpec(a.shape, lambda i: (0,) * a.ndim)

    return pl.pallas_call(
        generator_tab_kernel,
        out_shape=jax.ShapeDtypeStruct((b, img_shape), jnp.float32),
        grid=grid,
        in_specs=[
            pl.BlockSpec((tm, latent), lambda i: (i, 0)),   # z: batch-tiled
            resident(w1b), resident(b1),
            resident(w2b), resident(bn_scale), resident(bn_shift),
            resident(w3b), resident(b3),
        ],
        out_specs=pl.BlockSpec((tm, img_shape), lambda i: (i, 0)),
        compiler_params=pltpu.CompilerParams(
            dimension_semantics=("parallel",)),
    )(z_bf, w1b, b1, w2b, bn_scale, bn_shift, w3b, b3)


def init_params(key, latent_dim, img_shape):
    """Synthetic parameters matching nn.Linear / nn.BatchNorm1d shapes.

    Linear weights stored as (in, out) so y = x @ W + b (== x @ W_pt.T + b).
    Biases / BN params stored as (1, out) rows for TPU-friendly broadcasting.
    """
    ks = jax.random.split(key, 10)
    h1, h2 = 4 * latent_dim, 2 * latent_dim

    def lin(kw, kb, fan_in, fan_out):
        bound = 1.0 / jnp.sqrt(fan_in)
        w = jax.random.uniform(kw, (fan_in, fan_out), jnp.float32, -bound, bound)
        bias = jax.random.uniform(kb, (1, fan_out), jnp.float32, -bound, bound)
        return w, bias

    w1, b1 = lin(ks[0], ks[1], latent_dim, h1)
    w2, b2 = lin(ks[2], ks[3], h1, h2)
    w3, b3 = lin(ks[4], ks[5], h2, img_shape)

    # BatchNorm1d(2L, eps=0.8) parameters (non-trivial values to exercise BN).
    gamma = jax.random.uniform(ks[6], (1, h2), jnp.float32, 0.5, 1.5)
    beta = 0.1 * jax.random.normal(ks[7], (1, h2), jnp.float32)
    run_mean = 0.1 * jax.random.normal(ks[8], (1, h2), jnp.float32)
    run_var = jax.random.uniform(ks[9], (1, h2), jnp.float32, 0.5, 1.5)

    return (w1, b1, w2, b2, gamma, beta, run_mean, run_var, w3, b3)


def reference_forward(z, params):
    """Pure-JAX f32 reference (eval-mode BatchNorm)."""
    (w1, b1, w2, b2, gamma, beta, run_mean, run_var, w3, b3) = params
    h1 = z @ w1 + b1
    h1 = jnp.where(h1 > 0, h1, 0.2 * h1)
    h2 = h1 @ w2 + b2
    h2 = gamma * (h2 - run_mean) / jnp.sqrt(run_var + BN_EPS) + beta
    h2 = jnp.where(h2 > 0, h2, 0.2 * h2)
    return jnp.tanh(h2 @ w3 + b3)


if __name__ == "__main__":
    key = jax.random.PRNGKey(0)
    k_z, k_params = jax.random.split(key)

    latent_dim = 32          # -> hidden widths 128 and 64
    img_shape = 64           # tabular output width
    batch = 256              # amortizes resident-weight DMA over 2 grid steps

    z = jax.random.normal(k_z, (batch, latent_dim), dtype=jnp.float32)
    params = init_params(k_params, latent_dim, img_shape)

    out = generator_tab_forward(z, params)
    out = jax.block_until_ready(out)

    ref = reference_forward(z, params)
    assert out.shape == (batch, img_shape), out.shape
    # bf16 weights/activations at the MXU inputs -> loosened tolerance vs f32 ref.
    assert jnp.allclose(out, ref, atol=5e-2, rtol=5e-2), (
        "mismatch vs reference, max abs err = "
        f"{float(jnp.max(jnp.abs(out - ref)))}")

    print("KERNEL_OK")
</pallas_src>

<mosaic_0001>
module attributes {stable_mosaic.version = 11 : i64} {
  func.func @generator_tab_kernel(%arg0: i32, %arg1: memref<128x32xbf16, #tpu.memory_space<vmem>>, %arg2: memref<32x128xbf16, #tpu.memory_space<vmem>>, %arg3: memref<1x128xf32, #tpu.memory_space<vmem>>, %arg4: memref<128x64xbf16, #tpu.memory_space<vmem>>, %arg5: memref<1x64xf32, #tpu.memory_space<vmem>>, %arg6: memref<1x64xf32, #tpu.memory_space<vmem>>, %arg7: memref<64x64xbf16, #tpu.memory_space<vmem>>, %arg8: memref<1x64xf32, #tpu.memory_space<vmem>>, %arg9: memref<128x64xf32, #tpu.memory_space<vmem>>) attributes {dimension_semantics = [#tpu.dimension_semantics<parallel>], iteration_bounds = array<i64: 2>, scalar_prefetch = 0 : i64, scratch_operands = 0 : i64, tpu.core_type = #tpu.core_type<tc>, window_params = [{transform_indices = @transform_0, window_bounds = array<i64: 128, 32>}, {pipeline_mode = #tpu.pipeline_mode<synchronous>, transform_indices = @transform_1, window_bounds = array<i64: 32, 128>}, {pipeline_mode = #tpu.pipeline_mode<synchronous>, transform_indices = @transform_2, window_bounds = array<i64: 1, 128>}, {pipeline_mode = #tpu.pipeline_mode<synchronous>, transform_indices = @transform_3, window_bounds = array<i64: 128, 64>}, {pipeline_mode = #tpu.pipeline_mode<synchronous>, transform_indices = @transform_4, window_bounds = array<i64: 1, 64>}, {pipeline_mode = #tpu.pipeline_mode<synchronous>, transform_indices = @transform_5, window_bounds = array<i64: 1, 64>}, {pipeline_mode = #tpu.pipeline_mode<synchronous>, transform_indices = @transform_6, window_bounds = array<i64: 64, 64>}, {pipeline_mode = #tpu.pipeline_mode<synchronous>, transform_indices = @transform_7, window_bounds = array<i64: 1, 64>}, {transform_indices = @transform_8, window_bounds = array<i64: 128, 64>}]} {
    %c0 = arith.constant 0 : index
    %c0_0 = arith.constant 0 : index
    %0 = vector.load %arg1[%c0, %c0_0] : memref<128x32xbf16, #tpu.memory_space<vmem>>, vector<128x32xbf16>
    %c0_1 = arith.constant 0 : index
    %c0_2 = arith.constant 0 : index
    %1 = vector.load %arg2[%c0_1, %c0_2] : memref<32x128xbf16, #tpu.memory_space<vmem>>, vector<32x128xbf16>
    %cst = arith.constant dense<0.000000e+00> : vector<128x128xf32>
    %2 = tpu.matmul %0, %1, %cst {dimension_numbers = #tpu.dot_dimension_numbers<[1], [0], [0], [1], [0, 0, 1, 1], [], []>} : vector<128x32xbf16>, vector<32x128xbf16>, vector<128x128xf32> -> vector<128x128xf32>
    %c0_3 = arith.constant 0 : index
    %c0_4 = arith.constant 0 : index
    %3 = vector.load %arg3[%c0_3, %c0_4] : memref<1x128xf32, #tpu.memory_space<vmem>>, vector<1x128xf32>
    %4 = vector.broadcast %3 : vector<1x128xf32> to vector<128x128xf32>
    %5 = arith.addf %2, %4 : vector<128x128xf32>
    %cst_5 = arith.constant 0.000000e+00 : f32
    %6 = vector.broadcast %cst_5 : f32 to vector<128x128xf32>
    %7 = arith.cmpf ogt, %5, %6 : vector<128x128xf32>
    %cst_6 = arith.constant 2.000000e-01 : f32
    %8 = vector.broadcast %cst_6 : f32 to vector<128x128xf32>
    %9 = arith.mulf %8, %5 : vector<128x128xf32>
    %10 = arith.select %7, %5, %9 : vector<128x128xi1>, vector<128x128xf32>
    %11 = arith.truncf %10 : vector<128x128xf32> to vector<128x128xbf16>
    %c0_7 = arith.constant 0 : index
    %c0_8 = arith.constant 0 : index
    %12 = vector.load %arg4[%c0_7, %c0_8] : memref<128x64xbf16, #tpu.memory_space<vmem>>, vector<128x64xbf16>
    %cst_9 = arith.constant dense<0.000000e+00> : vector<128x64xf32>
    %13 = tpu.matmul %11, %12, %cst_9 {dimension_numbers = #tpu.dot_dimension_numbers<[1], [0], [0], [1], [0, 0, 1, 1], [], []>} : vector<128x128xbf16>, vector<128x64xbf16>, vector<128x64xf32> -> vector<128x64xf32>
    %c0_10 = arith.constant 0 : index
    %c0_11 = arith.constant 0 : index
    %14 = vector.load %arg5[%c0_10, %c0_11] : memref<1x64xf32, #tpu.memory_space<vmem>>, vector<1x64xf32>
    %15 = vector.broadcast %14 : vector<1x64xf32> to vector<128x64xf32>
    %16 = arith.mulf %13, %15 : vector<128x64xf32>
    %c0_12 = arith.constant 0 : index
    %c0_13 = arith.constant 0 : index
    %17 = vector.load %arg6[%c0_12, %c0_13] : memref<1x64xf32, #tpu.memory_space<vmem>>, vector<1x64xf32>
    %18 = vector.broadcast %17 : vector<1x64xf32> to vector<128x64xf32>
    %19 = arith.addf %16, %18 : vector<128x64xf32>
    %cst_14 = arith.constant 0.000000e+00 : f32
    %20 = vector.broadcast %cst_14 : f32 to vector<128x64xf32>
    %21 = arith.cmpf ogt, %19, %20 : vector<128x64xf32>
    %cst_15 = arith.constant 2.000000e-01 : f32
    %22 = vector.broadcast %cst_15 : f32 to vector<128x64xf32>
    %23 = arith.mulf %22, %19 : vector<128x64xf32>
    %24 = arith.select %21, %19, %23 : vector<128x64xi1>, vector<128x64xf32>
    %25 = arith.truncf %24 : vector<128x64xf32> to vector<128x64xbf16>
    %c0_16 = arith.constant 0 : index
    %c0_17 = arith.constant 0 : index
    %26 = vector.load %arg7[%c0_16, %c0_17] : memref<64x64xbf16, #tpu.memory_space<vmem>>, vector<64x64xbf16>
    %cst_18 = arith.constant dense<0.000000e+00> : vector<128x64xf32>
    %27 = tpu.matmul %25, %26, %cst_18 {dimension_numbers = #tpu.dot_dimension_numbers<[1], [0], [0], [1], [0, 0, 1, 1], [], []>} : vector<128x64xbf16>, vector<64x64xbf16>, vector<128x64xf32> -> vector<128x64xf32>
    %c0_19 = arith.constant 0 : index
    %c0_20 = arith.constant 0 : index
    %28 = vector.load %arg8[%c0_19, %c0_20] : memref<1x64xf32, #tpu.memory_space<vmem>>, vector<1x64xf32>
    %29 = vector.broadcast %28 : vector<1x64xf32> to vector<128x64xf32>
    %30 = arith.addf %27, %29 : vector<128x64xf32>
    %31 = math.tanh %30 : vector<128x64xf32>
    %c0_21 = arith.constant 0 : index
    %c0_22 = arith.constant 0 : index
    %32 = vector.load %arg9[%c0_21, %c0_22] : memref<128x64xf32, #tpu.memory_space<vmem>>, vector<128x64xf32>
    tpu.vector_store %arg9[%c0_21, %c0_22], %31 {strides = array<i32>} : memref<128x64xf32, #tpu.memory_space<vmem>>, vector<128x64xf32>,
    return
  }
  func.func @transform_0(%arg0: i32) -> (i32, i32) {
    %c0_i32 = arith.constant 0 : i32
    %c0_i32_0 = arith.constant 0 : i32
    return %arg0, %c0_i32 : i32, i32
  }
  func.func @transform_1(%arg0: i32) -> (i32, i32) {
    %c0_i32 = arith.constant 0 : i32
    %c0_i32_0 = arith.constant 0 : i32
    %c0_i32_1 = arith.constant 0 : i32
    return %c0_i32, %c0_i32_0 : i32, i32
  }
  func.func @transform_2(%arg0: i32) -> (i32, i32) {
    %c0_i32 = arith.constant 0 : i32
    %c0_i32_0 = arith.constant 0 : i32
    %c0_i32_1 = arith.constant 0 : i32
    return %c0_i32, %c0_i32_0 : i32, i32
  }
  func.func @transform_3(%arg0: i32) -> (i32, i32) {
    %c0_i32 = arith.constant 0 : i32
    %c0_i32_0 = arith.constant 0 : i32
    %c0_i32_1 = arith.constant 0 : i32
    return %c0_i32, %c0_i32_0 : i32, i32
  }
  func.func @transform_4(%arg0: i32) -> (i32, i32) {
    %c0_i32 = arith.constant 0 : i32
    %c0_i32_0 = arith.constant 0 : i32
    %c0_i32_1 = arith.constant 0 : i32
    return %c0_i32, %c0_i32_0 : i32, i32
  }
  func.func @transform_5(%arg0: i32) -> (i32, i32) {
    %c0_i32 = arith.constant 0 : i32
    %c0_i32_0 = arith.constant 0 : i32
    %c0_i32_1 = arith.constant 0 : i32
    return %c0_i32, %c0_i32_0 : i32, i32
  }
  func.func @transform_6(%arg0: i32) -> (i32, i32) {
    %c0_i32 = arith.constant 0 : i32
    %c0_i32_0 = arith.constant 0 : i32
    %c0_i32_1 = arith.constant 0 : i32
    return %c0_i32, %c0_i32_0 : i32, i32
  }
  func.func @transform_7(%arg0: i32) -> (i32, i32) {
    %c0_i32 = arith.constant 0 : i32
    %c0_i32_0 = arith.constant 0 : i32
    %c0_i32_1 = arith.constant 0 : i32
    return %c0_i32, %c0_i32_0 : i32, i32
  }
  func.func @transform_8(%arg0: i32) -> (i32, i32) {
    %c0_i32 = arith.constant 0 : i32
    %c0_i32_0 = arith.constant 0 : i32
    return %arg0, %c0_i32 : i32, i32
  }
}

</mosaic_0001>

<llo_original>
// kernel: tpu_custom_call.1
$region0: #{tpu_custom_call.1}
  #allocation0 [shape = 'u32[]', space=smem, size = 0x4, offset = 0x4, fixed_abs, tag = 'smem constant byte address 0x4 - core index']
  #allocation1 [shape = 'u32[144,128]{1,0:T(1,128)}', space=vmem, size = 0x12000, scoped, tag = 'internal scratch']
  %s0 = inlined_call_operand.vmem [shape: bf16[256,32], index: 0, kind: input, shape index: {}]
  %s1 = inlined_call_operand.vmem [shape: bf16[32,128], index: 1, kind: input, shape index: {}]
  %s2 = inlined_call_operand.vmem [shape: f32[1,128], index: 2, kind: input, shape index: {}]
  %s3 = inlined_call_operand.vmem [shape: bf16[128,64], index: 3, kind: input, shape index: {}]
  %s4 = inlined_call_operand.vmem [shape: f32[1,64], index: 4, kind: input, shape index: {}]
  %s5 = inlined_call_operand.vmem [shape: f32[1,64], index: 5, kind: input, shape index: {}]
  %s6 = inlined_call_operand.vmem [shape: bf16[64,64], index: 6, kind: input, shape index: {}]
  %s7 = inlined_call_operand.vmem [shape: f32[1,64], index: 7, kind: input, shape index: {}]
  %s8 = inlined_call_operand.vmem [shape: f32[256,64], index: 8, kind: output, shape index: {}]
  %s9 = sld [smem:[#allocation0]]
  $region65: #{tpu_custom_call.1} parent=0
    _
  %s11 = ssub.s32 1, %s9
  %s12 = scalar_select 0, %s11, %s9
  loop: start=0, step=1, limit=4
  $region2: #{tpu_custom_call.1} parent=0 // loop_pre_header
    _
  $region3: #{tpu_custom_call.1} parent=0 // loop_header
    %s14 = sphi 0, %s18
    %p15 = scmp.ge.s32.totalorder %s14, 4
    %s24 = sphi 0, %s26
    %s27 = sphi 0, %s24
    %s28 = sphi 0, %s27
    %s44 = sphi 0, %s28
    %s48 = sphi 0, %s48
    %s50 = sphi 0, %s48
    %s51 = sphi 0, %s50
    %s65 = sphi 0, %s51
    %s69 = sphi 0, %s69
    %s71 = sphi 0, %s69
    %s72 = sphi 0, %s71
    %s86 = sphi 0, %s72
    %s90 = sphi 0, %s90
    %s92 = sphi 0, %s90
    %s93 = sphi 0, %s92
    %s107 = sphi 0, %s93
    %s111 = sphi 0, %s111
    %s113 = sphi 0, %s111
    %s114 = sphi 0, %s113
    %s128 = sphi 0, %s114
    %s132 = sphi 0, %s132
    %s134 = sphi 0, %s132
    %s135 = sphi 0, %s134
    %s149 = sphi 0, %s135
    %s153 = sphi 0, %s153
    %s155 = sphi 0, %s153
    %s156 = sphi 0, %s155
    %s170 = sphi 0, %s156
    %s174 = sphi 0, %s174
    %s176 = sphi 0, %s174
    %s177 = sphi 0, %s176
    %s191 = sphi 0, %s177
    %s197 = sphi 0, %s199
    %s200 = sphi 0, %s197
    %s201 = sphi 0, %s200
    %s217 = sphi 0, %s201
  $region4: #{tpu_custom_call.1} parent=0 // loop_header_branch
    %17 = sbr.rel (%p15) target = $region8
  $region5: #{tpu_custom_call.1} parent=0 // loop_body
    %s19 = ssub.s32 %s14, 1
    %s20 = ssub.s32 %s14, 2
    %s21 = sadd.s32 %s14, 1
    %s22 = ssub.s32 %s14, %s21
    %p23 = scmp.eq.s32.totalorder %s22, 0
    %s25 = sadd.s32 %s24, 1
    %s26 = scalar_select %p23, %s24, %s25
    %p29 = pneg %p23
    %p30 = scmp.eq.s32.totalorder %s14, 1
    %p31 = por %p29, %p30
    %p32 = scmp.ne.s32.totalorder %s24, %s27
    %p33 = scmp.eq.s32.totalorder %s14, 0
    %p34 = por %p32, %p33
    %p35 = scmp.ne.s32.totalorder %s24, %s27
    %p36 = scmp.eq.s32.totalorder %s19, 1
    %p37 = por %p35, %p36
    %p38 = scmp.ne.s32.totalorder %s27, %s28
    %p39 = scmp.eq.s32.totalorder %s19, 0
    %p40 = por %p38, %p39
    %p41 = scmp.ne.s32.totalorder %s27, %s28
    %p42 = scmp.eq.s32.totalorder %s20, 1
    %p43 = por %p41, %p42
    %p45 = scmp.ne.s32.totalorder %s28, %s44
    %p46 = scmp.eq.s32.totalorder %s20, 0
    %p47 = por %p45, %p46
    %s49 = sadd.s32 %s48, 1
    %p52 = scmp.eq.s32.totalorder %s14, 1
    %p53 = scmp.ne.s32.totalorder %s48, %s50
    %p54 = scmp.eq.s32.totalorder %s14, 0
    %p55 = por %p53, %p54
    %p56 = scmp.ne.s32.totalorder %s48, %s50
    %p57 = scmp.eq.s32.totalorder %s19, 1
    %p58 = por %p56, %p57
    %p59 = scmp.ne.s32.totalorder %s50, %s51
    %p60 = scmp.eq.s32.totalorder %s19, 0
    %p61 = por %p59, %p60
    %p62 = scmp.ne.s32.totalorder %s50, %s51
    %p63 = scmp.eq.s32.totalorder %s20, 1
    %p64 = por %p62, %p63
    %p66 = scmp.ne.s32.totalorder %s51, %s65
    %p67 = scmp.eq.s32.totalorder %s20, 0
    %p68 = por %p66, %p67
    %s70 = sadd.s32 %s69, 1
    %p73 = scmp.eq.s32.totalorder %s14, 1
    %p74 = scmp.ne.s32.totalorder %s69, %s71
    %p75 = scmp.eq.s32.totalorder %s14, 0
    %p76 = por %p74, %p75
    %p77 = scmp.ne.s32.totalorder %s69, %s71
    %p78 = scmp.eq.s32.totalorder %s19, 1
    %p79 = por %p77, %p78
    %p80 = scmp.ne.s32.totalorder %s71, %s72
    %p81 = scmp.eq.s32.totalorder %s19, 0
    %p82 = por %p80, %p81
    %p83 = scmp.ne.s32.totalorder %s71, %s72
    %p84 = scmp.eq.s32.totalorder %s20, 1
    %p85 = por %p83, %p84
    %p87 = scmp.ne.s32.totalorder %s72, %s86
    %p88 = scmp.eq.s32.totalorder %s20, 0
    %p89 = por %p87, %p88
    %s91 = sadd.s32 %s90, 1
    %p94 = scmp.eq.s32.totalorder %s14, 1
    %p95 = scmp.ne.s32.totalorder %s90, %s92
    %p96 = scmp.eq.s32.totalorder %s14, 0
    %p97 = por %p95, %p96
    %p98 = scmp.ne.s32.totalorder %s90, %s92
    %p99 = scmp.eq.s32.totalorder %s19, 1
    %p100 = por %p98, %p99
    %p101 = scmp.ne.s32.totalorder %s92, %s93
    %p102 = scmp.eq.s32.totalorder %s19, 0
    %p103 = por %p101, %p102
    %p104 = scmp.ne.s32.totalorder %s92, %s93
    %p105 = scmp.eq.s32.totalorder %s20, 1
    %p106 = por %p104, %p105
    %p108 = scmp.ne.s32.totalorder %s93, %s107
    %p109 = scmp.eq.s32.totalorder %s20, 0
    %p110 = por %p108, %p109
    %s112 = sadd.s32 %s111, 1
    %p115 = scmp.eq.s32.totalorder %s14, 1
    %p116 = scmp.ne.s32.totalorder %s111, %s113
    %p117 = scmp.eq.s32.totalorder %s14, 0
    %p118 = por %p116, %p117
    %p119 = scmp.ne.s32.totalorder %s111, %s113
    %p120 = scmp.eq.s32.totalorder %s19, 1
    %p121 = por %p119, %p120
    %p122 = scmp.ne.s32.totalorder %s113, %s114
    %p123 = scmp.eq.s32.totalorder %s19, 0
    %p124 = por %p122, %p123
    %p125 = scmp.ne.s32.totalorder %s113, %s114
    %p126 = scmp.eq.s32.totalorder %s20, 1
    %p127 = por %p125, %p126
    %p129 = scmp.ne.s32.totalorder %s114, %s128
    %p130 = scmp.eq.s32.totalorder %s20, 0
    %p131 = por %p129, %p130
    %s133 = sadd.s32 %s132, 1
    %p136 = scmp.eq.s32.totalorder %s14, 1
    %p137 = scmp.ne.s32.totalorder %s132, %s134
    %p138 = scmp.eq.s32.totalorder %s14, 0
    %p139 = por %p137, %p138
    %p140 = scmp.ne.s32.totalorder %s132, %s134
    %p141 = scmp.eq.s32.totalorder %s19, 1
    %p142 = por %p140, %p141
    %p143 = scmp.ne.s32.totalorder %s134, %s135
    %p144 = scmp.eq.s32.totalorder %s19, 0
    %p145 = por %p143, %p144
    %p146 = scmp.ne.s32.totalorder %s134, %s135
    %p147 = scmp.eq.s32.totalorder %s20, 1
    %p148 = por %p146, %p147
    %p150 = scmp.ne.s32.totalorder %s135, %s149
    %p151 = scmp.eq.s32.totalorder %s20, 0
    %p152 = por %p150, %p151
    %s154 = sadd.s32 %s153, 1
    %p157 = scmp.eq.s32.totalorder %s14, 1
    %p158 = scmp.ne.s32.totalorder %s153, %s155
    %p159 = scmp.eq.s32.totalorder %s14, 0
    %p160 = por %p158, %p159
    %p161 = scmp.ne.s32.totalorder %s153, %s155
    %p162 = scmp.eq.s32.totalorder %s19, 1
    %p163 = por %p161, %p162
    %p164 = scmp.ne.s32.totalorder %s155, %s156
    %p165 = scmp.eq.s32.totalorder %s19, 0
    %p166 = por %p164, %p165
    %p167 = scmp.ne.s32.totalorder %s155, %s156
    %p168 = scmp.eq.s32.totalorder %s20, 1
    %p169 = por %p167, %p168
    %p171 = scmp.ne.s32.totalorder %s156, %s170
    %p172 = scmp.eq.s32.totalorder %s20, 0
    %p173 = por %p171, %p172
    %s175 = sadd.s32 %s174, 1
    %p178 = scmp.eq.s32.totalorder %s14, 1
    %p179 = scmp.ne.s32.totalorder %s174, %s176
    %p180 = scmp.eq.s32.totalorder %s14, 0
    %p181 = por %p179, %p180
    %p182 = scmp.ne.s32.totalorder %s174, %s176
    %p183 = scmp.eq.s32.totalorder %s19, 1
    %p184 = por %p182, %p183
    %p185 = scmp.ne.s32.totalorder %s176, %s177
    %p186 = scmp.eq.s32.totalorder %s19, 0
    %p187 = por %p185, %p186
    %p188 = scmp.ne.s32.totalorder %s176, %s177
    %p189 = scmp.eq.s32.totalorder %s20, 1
    %p190 = por %p188, %p189
    %p192 = scmp.ne.s32.totalorder %s177, %s191
    %p193 = scmp.eq.s32.totalorder %s20, 0
    %p194 = por %p192, %p193
    %s195 = ssub.s32 %s14, %s21
    %p196 = scmp.eq.s32.totalorder %s195, 0
    %s198 = sadd.s32 %s197, 1
    %s199 = scalar_select %p196, %s197, %s198
    %p202 = pneg %p196
    %p203 = scmp.eq.s32.totalorder %s14, 1
    %p204 = por %p202, %p203
    %p205 = scmp.ne.s32.totalorder %s197, %s200
    %p206 = scmp.eq.s32.totalorder %s14, 0
    %p207 = por %p205, %p206
    %p208 = scmp.ne.s32.totalorder %s197, %s200
    %p209 = scmp.eq.s32.totalorder %s19, 1
    %p210 = por %p208, %p209
    %p211 = scmp.ne.s32.totalorder %s200, %s201
    %p212 = scmp.eq.s32.totalorder %s19, 0
    %p213 = por %p211, %p212
    %p214 = scmp.ne.s32.totalorder %s200, %s201
    %p215 = scmp.eq.s32.totalorder %s20, 1
    %p216 = por %p214, %p215
    %p218 = scmp.ne.s32.totalorder %s201, %s217
    %p219 = scmp.eq.s32.totalorder %s20, 0
    %p220 = por %p218, %p219
    %p221 = scmp.le.s32.totalorder 1, %s14
    %p222 = scmp.lt.s32.totalorder %s14, 3
    %p223 = pnand %p221, %p222
    %p224 = pneg %p223
    // Predicated region
    $region9: #{tpu_custom_call.1} parent=5 // pred_check
      _
    $region10: #{tpu_custom_call.1} parent=5 // pred_check_branch
      %226 = sbr.rel (%p223) target = $region12
    $region11: #{tpu_custom_call.1} parent=5 // pred_region
      %s227 = ssub.s32 %s14, 1
      // Predicated region
      $region13: #{tpu_custom_call.1} parent=11 // pred_check
        %p228 = pneg %p61
      $region14: #{tpu_custom_call.1} parent=11 // pred_check_branch
        %230 = sbr.rel (%p228) target = $region16
      $region15: #{tpu_custom_call.1} parent=11 // pred_region
        _
      $region16: #{tpu_custom_call.1} parent=11 // pred_fallthru
        _
      // Predicated region
      $region17: #{tpu_custom_call.1} parent=11 // pred_check
        %p231 = pneg %p82
      $region18: #{tpu_custom_call.1} parent=11 // pred_check_branch
        %233 = sbr.rel (%p231) target = $region20
      $region19: #{tpu_custom_call.1} parent=11 // pred_region
        _
      $region20: #{tpu_custom_call.1} parent=11 // pred_fallthru
        _
      // Predicated region
      $region21: #{tpu_custom_call.1} parent=11 // pred_check
        %p234 = pneg %p103
      $region22: #{tpu_custom_call.1} parent=11 // pred_check_branch
        %236 = sbr.rel (%p234) target = $region24
      $region23: #{tpu_custom_call.1} parent=11 // pred_region
        _
      $region24: #{tpu_custom_call.1} parent=11 // pred_fallthru
        _
      // Predicated region
      $region25: #{tpu_custom_call.1} parent=11 // pred_check
        %p237 = pneg %p124
      $region26: #{tpu_custom_call.1} parent=11 // pred_check_branch
        %239 = sbr.rel (%p237) target = $region28
      $region27: #{tpu_custom_call.1} parent=11 // pred_region
        _
      $region28: #{tpu_custom_call.1} parent=11 // pred_fallthru
        _
      // Predicated region
      $region29: #{tpu_custom_call.1} parent=11 // pred_check
        %p240 = pneg %p145
      $region30: #{tpu_custom_call.1} parent=11 // pred_check_branch
        %242 = sbr.rel (%p240) target = $region32
      $region31: #{tpu_custom_call.1} parent=11 // pred_region
        _
      $region32: #{tpu_custom_call.1} parent=11 // pred_fallthru
        _
      // Predicated region
      $region33: #{tpu_custom_call.1} parent=11 // pred_check
        %p243 = pneg %p166
      $region34: #{tpu_custom_call.1} parent=11 // pred_check_branch
        %245 = sbr.rel (%p243) target = $region36
      $region35: #{tpu_custom_call.1} parent=11 // pred_region
        _
      $region36: #{tpu_custom_call.1} parent=11 // pred_fallthru
        _
      // Predicated region
      $region37: #{tpu_custom_call.1} parent=11 // pred_check
        %p246 = pneg %p187
      $region38: #{tpu_custom_call.1} parent=11 // pred_check_branch
        %248 = sbr.rel (%p246) target = $region40
      $region39: #{tpu_custom_call.1} parent=11 // pred_region
        _
      $region40: #{tpu_custom_call.1} parent=11 // pred_fallthru
        _
    $region12: #{tpu_custom_call.1} parent=5 // pred_fallthru
      _
    %p249 = scmp.lt.s32.totalorder %s14, 2
    // Predicated region
    $region41: #{tpu_custom_call.1} parent=5 // pred_check
      %p250 = pneg %p249
    $region42: #{tpu_custom_call.1} parent=5 // pred_check_branch
      %252 = sbr.rel (%p250) target = $region44
    $region43: #{tpu_custom_call.1} parent=5 // pred_region
      // Predicated region
      $region45: #{tpu_custom_call.1} parent=43 // pred_check
        %p253 = pneg %p34
      $region46: #{tpu_custom_call.1} parent=43 // pred_check_branch
        %255 = sbr.rel (%p253) target = $region48
      $region47: #{tpu_custom_call.1} parent=43 // pred_region
        %s256 = smul.u32 16, %s14
        %p257 = scmp.lt.s32.totalorder %s256, 31
        %s258 = scalar_select %p257, %s256, 31
        %s259 = smul.addr %s258, 4
        %s260 = scalar_lea.vmem %s0, %s259
        %s261 = smul.u32 16, %s14
      $region48: #{tpu_custom_call.1} parent=43 // pred_fallthru
        _
    $region44: #{tpu_custom_call.1} parent=5 // pred_fallthru
      _
    %p262 = scmp.le.s32.totalorder 1, %s14
    %p263 = scmp.lt.s32.totalorder %s14, 3
    %p264 = pnand %p262, %p263
    %p265 = pneg %p264
    // Predicated region
    $region49: #{tpu_custom_call.1} parent=5 // pred_check
      _
    $region50: #{tpu_custom_call.1} parent=5 // pred_check_branch
      %267 = sbr.rel (%p264) target = $region52
    $region51: #{tpu_custom_call.1} parent=5 // pred_region
      %s268 = ssub.s32 %s14, 1
      %s269 = smul.u32 16, %s19
      %p270 = scmp.lt.s32.totalorder %s269, 31
      %s271 = scalar_select %p270, %s269, 31
      %s272 = smul.addr %s271, 4
      %s273 = scalar_lea.vmem %s0, %s272
      %p274 = pneg %p40
      %p275 = pneg %p37
      %p276 = pneg %p61
      %p277 = pneg %p58
      %p278 = pneg %p82
      %p279 = pneg %p79
      %p280 = pneg %p103
      %p281 = pneg %p100
      %p282 = pneg %p124
      %p283 = pneg %p121
      %p284 = pneg %p145
      %p285 = pneg %p142
      %p286 = pneg %p166
      %p287 = pneg %p163
      %p288 = pneg %p187
      %p289 = pneg %p184
      %p290 = pneg %p213
      %p291 = pneg %p210
      %s292 = smul.u32 16, %s19
      %p293 = scmp.lt.s32.totalorder %s292, 31
      %s294 = scalar_select %p293, %s292, 31
      %s295 = smul.addr %s294, 8
      %s296 = scalar_lea.vmem %s8, %s295
      %s297 = smul.u32 16, %s19
      %p298 = scmp.lt.s32.totalorder %s297, 31
      %s299 = scalar_select %p298, %s297, 31
      %s300 = smul.addr %s299, 4
      %s301 = scalar_lea.vmem %s0, %s300
      %s302 = smul.u32 16, %s19
      %s303 = smul.u32 16, %s19
      %p304 = scmp.lt.s32.totalorder %s303, 31
      %s305 = scalar_select %p304, %s303, 31
      %s306 = smul.addr %s305, 8
      %s307 = scalar_lea.vmem %s8, %s306
      %s308 = smul.u32 16, %s19
      %v310 = vld [vmem:[%s301] sm:$0xf]
      %v311 = vld [vmem:[%s301 + $0x4] sm:$0xf]
      %v312 = vld [vmem:[%s301 + $0x8] sm:$0xf]
      %v313 = vld [vmem:[%s301 + $0xc] sm:$0xf]
      %v314 = vld [vmem:[%s301 + $0x10] sm:$0xf]
      %v315 = vld [vmem:[%s301 + $0x14] sm:$0xf]
      %v316 = vld [vmem:[%s301 + $0x18] sm:$0xf]
      %v317 = vld [vmem:[%s301 + $0x1c] sm:$0xf]
      %v318 = vld [vmem:[%s301 + $0x20] sm:$0xf]
      %v319 = vld [vmem:[%s301 + $0x24] sm:$0xf]
      %v320 = vld [vmem:[%s301 + $0x28] sm:$0xf]
      %v321 = vld [vmem:[%s301 + $0x2c] sm:$0xf]
      %v322 = vld [vmem:[%s301 + $0x30] sm:$0xf]
      %v323 = vld [vmem:[%s301 + $0x34] sm:$0xf]
      %v324 = vld [vmem:[%s301 + $0x38] sm:$0xf]
      %v325 = vld [vmem:[%s301 + $0x3c] sm:$0xf]
      %v326 = vld [vmem:[%s1] sm:$0xf]
      %v327 = vld [vmem:[%s1 + $0x4] sm:$0xf]
      %v328 = vld [vmem:[%s1 + $0x8] sm:$0xf]
      %v329 = vld [vmem:[%s1 + $0xc] sm:$0xf]
      %v330 = vld [vmem:[%s2] sm:$0x1]
      %v332 = vlaneseq
      %v333 = vshrl.u32 %v332, 7
      %v334 = vsub.s32 0, %v333
      %v335 = vrot.slane %v330, %v334
      %v353 = vunpack.c.l.b16 %v310
      %v354 = vunpack.c.l.b16 %v311
      %v355 = vunpack.c.l.b16 %v312
      %v356 = vunpack.c.l.b16 %v313
      %v357 = vunpack.c.l.b16 %v314
      %v358 = vunpack.c.l.b16 %v315
      %v359 = vunpack.c.l.b16 %v316
      %v360 = vunpack.c.l.b16 %v317
      %v361 = vunpack.c.l.b16 %v318
      %v362 = vunpack.c.l.b16 %v319
      %v363 = vunpack.c.l.b16 %v320
      %v364 = vunpack.c.l.b16 %v321
      %v365 = vunpack.c.l.b16 %v322
      %v366 = vunpack.c.l.b16 %v323
      %v367 = vunpack.c.l.b16 %v324
      %v368 = vunpack.c.l.b16 %v325
      %v369 = vpack.c.b16 %v354, %v353
      %v370 = vpack.c.b16 %v356, %v355
      %v371 = vpack.c.b16 %v358, %v357
      %v372 = vpack.c.b16 %v360, %v359
      %v373 = vpack.c.b16 %v362, %v361
      %v374 = vpack.c.b16 %v364, %v363
      %v375 = vpack.c.b16 %v366, %v365
      %v376 = vpack.c.b16 %v368, %v367
      %v381 = vunpack.c.l.b16 %v326
      %v382 = vunpack.c.l.b16 %v327
      %v383 = vunpack.c.l.b16 %v328
      %v384 = vunpack.c.l.b16 %v329
      %v385 = vpack.c.b16 %v382, %v381
      %v386 = vpack.c.b16 %v384, %v383
      %vm389 = vcmask 261120
      %v391 = vsel %vm389, %v369, 0
      %v394 = vsel %vm389, %v370, 0
      %v397 = vsel %vm389, %v371, 0
      %v400 = vsel %vm389, %v372, 0
      %v403 = vsel %vm389, %v373, 0
      %v406 = vsel %vm389, %v374, 0
      %v409 = vsel %vm389, %v375, 0
      %v412 = vsel %vm389, %v376, 0
      %414 = vmatprep.subr.bf16.mxu0 0
      %415 = vmatpush1.bf16.msra.mxu0 %v385
      %416 = vmatprep.subr.bf16.mxu0 0
      %417 = vmatpush1.bf16.msra.mxu0 %v386
      %418 = vmatprep.subr.bf16.mxu0 0
      %419 = vmatpush1.bf16.msra.mxu0 0
      %420 = vmatprep.subr.bf16.mxu0 0
      %421 = vmatpush1.bf16.msra.mxu0 0
      %422 = vmatprep.subr.bf16.mxu0 0
      %423 = vmatpush1.bf16.msra.mxu0 0
      %424 = vmatprep.subr.bf16.mxu0 0
      %425 = vmatpush1.bf16.msra.mxu0 0
      %426 = vmatprep.subr.bf16.mxu0 0
      %427 = vmatpush1.bf16.msra.mxu0 0
      %428 = vmatprep.subr.bf16.mxu0 0
      %429 = vmatpush1.bf16.msra.mxu0 0
      %430 = vmatprep.subr.bf16.mxu0 0
      %431 = vmatpush1.bf16.msra.mxu0 0
      %432 = vmatprep.subr.bf16.mxu0 0
      %433 = vmatpush1.bf16.msra.mxu0 0
      %434 = vmatprep.subr.bf16.mxu0 0
      %435 = vmatpush1.bf16.msra.mxu0 0
      %436 = vmatprep.subr.bf16.mxu0 0
      %437 = vmatpush1.bf16.msra.mxu0 0
      %438 = vmatprep.subr.bf16.mxu0 0
      %439 = vmatpush1.bf16.msra.mxu0 0
      %440 = vmatprep.subr.bf16.mxu0 0
      %441 = vmatpush1.bf16.msra.mxu0 0
      %442 = vmatprep.subr.bf16.mxu0 0
      %443 = vmatpush1.bf16.msra.mxu0 0
      %444 = vmatprep.subr.bf16.mxu0 0
      %445 = vmatpush1.bf16.msra.mxu0 0
      %446 = vmatprep.mubr.bf16.mxu0 0
      %447 = vmatmul.mubr.bf16.gmra.mrb[0].mxu0 %v391
      %v448 = vpop.f32.mrb[0].mxu0
      %v449 = vadd.f32 %v335, %v448
      %v450 = vpop.f32.mrb[0].mxu0
      %v451 = vpop.f32.mrb[0].mxu0
      %v452 = vadd.f32 %v335, %v451
      %v453 = vpop.f32.mrb[0].mxu0
      %454 = vmatprep.mubr.bf16.mxu0 0
      %455 = vmatmul.mubr.bf16.gmra.mrb[0].mxu0 %v394
      %v456 = vpop.f32.mrb[0].mxu0
      %v457 = vadd.f32 %v335, %v456
      %v458 = vpop.f32.mrb[0].mxu0
      %v459 = vpop.f32.mrb[0].mxu0
      %v460 = vadd.f32 %v335, %v459
      %v461 = vpop.f32.mrb[0].mxu0
      %462 = vmatprep.mubr.bf16.mxu0 0
      %463 = vmatmul.mubr.bf16.gmra.mrb[0].mxu0 %v397
      %v464 = vpop.f32.mrb[0].mxu0
      %v465 = vadd.f32 %v335, %v464
      %v466 = vpop.f32.mrb[0].mxu0
      %v467 = vpop.f32.mrb[0].mxu0
      %v468 = vadd.f32 %v335, %v467
      %v469 = vpop.f32.mrb[0].mxu0
      %470 = vmatprep.mubr.bf16.mxu0 0
      %471 = vmatmul.mubr.bf16.gmra.mrb[0].mxu0 %v400
      %v472 = vpop.f32.mrb[0].mxu0
      %v473 = vadd.f32 %v335, %v472
      %v474 = vpop.f32.mrb[0].mxu0
      %v475 = vpop.f32.mrb[0].mxu0
      %v476 = vadd.f32 %v335, %v475
      %v477 = vpop.f32.mrb[0].mxu0
      %478 = vmatprep.mubr.bf16.mxu0 0
      %479 = vmatmul.mubr.bf16.gmra.mrb[0].mxu0 %v403
      %v480 = vpop.f32.mrb[0].mxu0
      %v481 = vadd.f32 %v335, %v480
      %v482 = vpop.f32.mrb[0].mxu0
      %v483 = vpop.f32.mrb[0].mxu0
      %v484 = vadd.f32 %v335, %v483
      %v485 = vpop.f32.mrb[0].mxu0
      %486 = vmatprep.mubr.bf16.mxu0 0
      %487 = vmatmul.mubr.bf16.gmra.mrb[0].mxu0 %v406
      %v488 = vpop.f32.mrb[0].mxu0
      %v489 = vadd.f32 %v335, %v488
      %v490 = vpop.f32.mrb[0].mxu0
      %v491 = vpop.f32.mrb[0].mxu0
      %v492 = vadd.f32 %v335, %v491
      %v493 = vpop.f32.mrb[0].mxu0
      %494 = vmatprep.mubr.bf16.mxu0 0
      %495 = vmatmul.mubr.bf16.gmra.mrb[0].mxu0 %v409
      %v496 = vpop.f32.mrb[0].mxu0
      %v497 = vadd.f32 %v335, %v496
      %v498 = vpop.f32.mrb[0].mxu0
      %v499 = vpop.f32.mrb[0].mxu0
      %v500 = vadd.f32 %v335, %v499
      %v501 = vpop.f32.mrb[0].mxu0
      %502 = vmatprep.mubr.bf16.mxu0 0
      %503 = vmatmul.mubr.bf16.gmra.mrb[0].mxu0 %v412
      %v504 = vpop.f32.mrb[0].mxu0
      %v505 = vadd.f32 %v335, %v504
      %v506 = vpop.f32.mrb[0].mxu0
      %v507 = vpop.f32.mrb[0].mxu0
      %v508 = vadd.f32 %v335, %v507
      %v509 = vpop.f32.mrb[0].mxu0
      %510 = vdwg.mxu0
      %vm511 = vcmp.gt.f32.partialorder %v449, 0.0
      %vm512 = vcmp.gt.f32.partialorder %v452, 0.0
      %vm513 = vcmp.gt.f32.partialorder %v457, 0.0
      %vm514 = vcmp.gt.f32.partialorder %v460, 0.0
      %vm515 = vcmp.gt.f32.partialorder %v465, 0.0
      %vm516 = vcmp.gt.f32.partialorder %v468, 0.0
      %vm517 = vcmp.gt.f32.partialorder %v473, 0.0
      %vm518 = vcmp.gt.f32.partialorder %v476, 0.0
      %vm519 = vcmp.gt.f32.partialorder %v481, 0.0
      %vm520 = vcmp.gt.f32.partialorder %v484, 0.0
      %vm521 = vcmp.gt.f32.partialorder %v489, 0.0
      %vm522 = vcmp.gt.f32.partialorder %v492, 0.0
      %vm523 = vcmp.gt.f32.partialorder %v497, 0.0
      %vm524 = vcmp.gt.f32.partialorder %v500, 0.0
      %vm525 = vcmp.gt.f32.partialorder %v505, 0.0
      %vm526 = vcmp.gt.f32.partialorder %v508, 0.0
      %v527 = vmul.f32 %v449, 0.2
      %v528 = vmul.f32 %v452, 0.2
      %v529 = vmul.f32 %v457, 0.2
      %v530 = vmul.f32 %v460, 0.2
      %v531 = vmul.f32 %v465, 0.2
      %v532 = vmul.f32 %v468, 0.2
      %v533 = vmul.f32 %v473, 0.2
      %v534 = vmul.f32 %v476, 0.2
      %v535 = vmul.f32 %v481, 0.2
      %v536 = vmul.f32 %v484, 0.2
      %v537 = vmul.f32 %v489, 0.2
      %v538 = vmul.f32 %v492, 0.2
      %v539 = vmul.f32 %v497, 0.2
      %v540 = vmul.f32 %v500, 0.2
      %v541 = vmul.f32 %v505, 0.2
      %v542 = vmul.f32 %v508, 0.2
      %v543 = vsel %vm511, %v449, %v527
      %v544 = vsel %vm512, %v452, %v528
      %v545 = vsel %vm513, %v457, %v529
      %v546 = vsel %vm514, %v460, %v530
      %v547 = vsel %vm515, %v465, %v531
      %v548 = vsel %vm516, %v468, %v532
      %v549 = vsel %vm517, %v473, %v533
      %v550 = vsel %vm518, %v476, %v534
      %v551 = vsel %vm519, %v481, %v535
      %v552 = vsel %vm520, %v484, %v536
      %v553 = vsel %vm521, %v489, %v537
      %v554 = vsel %vm522, %v492, %v538
      %v555 = vsel %vm523, %v497, %v539
      %v556 = vsel %vm524, %v500, %v540
      %v557 = vsel %vm525, %v505, %v541
      %v558 = vsel %vm526, %v508, %v542
      %v559 = vpack.c.bf16 %v544, %v543
      %v560 = vpack.c.bf16 %v546, %v545
      %v561 = vpack.c.bf16 %v548, %v547
      %v562 = vpack.c.bf16 %v550, %v549
      %v563 = vpack.c.bf16 %v552, %v551
      %v564 = vpack.c.bf16 %v554, %v553
      %v565 = vpack.c.bf16 %v556, %v555
      %v566 = vpack.c.bf16 %v558, %v557
      %v567 = vld [vmem:[%s3] sm:$0xf]
      %v568 = vld [vmem:[%s3 + $0x4] sm:$0xf]
      %v569 = vld [vmem:[%s3 + $0x8] sm:$0xf]
      %v570 = vld [vmem:[%s3 + $0xc] sm:$0xf]
      %v571 = vld [vmem:[%s3 + $0x10] sm:$0xf]
      %v572 = vld [vmem:[%s3 + $0x14] sm:$0xf]
      %v573 = vld [vmem:[%s3 + $0x18] sm:$0xf]
      %v574 = vld [vmem:[%s3 + $0x1c] sm:$0xf]
      %v575 = vld [vmem:[%s3 + $0x20] sm:$0xf]
      %v576 = vld [vmem:[%s3 + $0x24] sm:$0xf]
      %v577 = vld [vmem:[%s3 + $0x28] sm:$0xf]
      %v578 = vld [vmem:[%s3 + $0x2c] sm:$0xf]
      %v579 = vld [vmem:[%s3 + $0x30] sm:$0xf]
      %v580 = vld [vmem:[%s3 + $0x34] sm:$0xf]
      %v581 = vld [vmem:[%s3 + $0x38] sm:$0xf]
      %v582 = vld [vmem:[%s3 + $0x3c] sm:$0xf]
      %v599 = vunpack.c.l.b16 %v567
      %v600 = vunpack.c.l.b16 %v568
      %v601 = vunpack.c.l.b16 %v569
      %v602 = vunpack.c.l.b16 %v570
      %v603 = vunpack.c.l.b16 %v571
      %v604 = vunpack.c.l.b16 %v572
      %v605 = vunpack.c.l.b16 %v573
      %v606 = vunpack.c.l.b16 %v574
      %v607 = vunpack.c.l.b16 %v575
      %v608 = vunpack.c.l.b16 %v576
      %v609 = vunpack.c.l.b16 %v577
      %v610 = vunpack.c.l.b16 %v578
      %v611 = vunpack.c.l.b16 %v579
      %v612 = vunpack.c.l.b16 %v580
      %v613 = vunpack.c.l.b16 %v581
      %v614 = vunpack.c.l.b16 %v582
      %v615 = vpack.c.b16 %v600, %v599
      %v616 = vpack.c.b16 %v602, %v601
      %v617 = vpack.c.b16 %v604, %v603
      %v618 = vpack.c.b16 %v606, %v605
      %v619 = vpack.c.b16 %v608, %v607
      %v620 = vpack.c.b16 %v610, %v609
      %v621 = vpack.c.b16 %v612, %v611
      %v622 = vpack.c.b16 %v614, %v613
      %631 = vmatprep.subr.bf16.mxu0 0
      %632 = vmatpush1.bf16.msra.mxu0 %v615
      %633 = vmatprep.subr.bf16.mxu0 0
      %634 = vmatpush1.bf16.msra.mxu0 %v616
      %635 = vmatprep.subr.bf16.mxu0 0
      %636 = vmatpush1.bf16.msra.mxu0 %v617
      %637 = vmatprep.subr.bf16.mxu0 0
      %638 = vmatpush1.bf16.msra.mxu0 %v618
      %639 = vmatprep.subr.bf16.mxu0 0
      %640 = vmatpush1.bf16.msra.mxu0 %v619
      %641 = vmatprep.subr.bf16.mxu0 0
      %642 = vmatpush1.bf16.msra.mxu0 %v620
      %643 = vmatprep.subr.bf16.mxu0 0
      %644 = vmatpush1.bf16.msra.mxu0 %v621
      %645 = vmatprep.subr.bf16.mxu0 0
      %646 = vmatpush1.bf16.msra.mxu0 %v622
      %647 = vmatprep.subr.bf16.mxu0 0
      %648 = vmatpush1.bf16.msra.mxu0 0
      %649 = vmatprep.subr.bf16.mxu0 0
      %650 = vmatpush1.bf16.msra.mxu0 0
      %651 = vmatprep.subr.bf16.mxu0 0
      %652 = vmatpush1.bf16.msra.mxu0 0
      %653 = vmatprep.subr.bf16.mxu0 0
      %654 = vmatpush1.bf16.msra.mxu0 0
      %655 = vmatprep.subr.bf16.mxu0 0
      %656 = vmatpush1.bf16.msra.mxu0 0
      %657 = vmatprep.subr.bf16.mxu0 0
      %658 = vmatpush1.bf16.msra.mxu0 0
      %659 = vmatprep.subr.bf16.mxu0 0
      %660 = vmatpush1.bf16.msra.mxu0 0
      %661 = vmatprep.subr.bf16.mxu0 0
      %662 = vmatpush1.bf16.msra.mxu0 0
      %663 = vmatprep.mubr.bf16.mxu0 0
      %664 = vmatmul.mubr.bf16.gmra.mrb[0].mxu0 %v559
      %v665 = vpop.f32.mrb[0].mxu0
      %v666 = vadd.f32 0.0, %v665
      %v667 = vpop.f32.mrb[0].mxu0
      %v668 = vpop.f32.mrb[0].mxu0
      %v669 = vadd.f32 0.0, %v668
      %v670 = vpop.f32.mrb[0].mxu0
      %671 = vmatprep.mubr.bf16.mxu0 0
      %672 = vmatmul.mubr.bf16.gmra.mrb[0].mxu0 %v560
      %v673 = vpop.f32.mrb[0].mxu0
      %v674 = vadd.f32 0.0, %v673
      %v675 = vpop.f32.mrb[0].mxu0
      %v676 = vpop.f32.mrb[0].mxu0
      %v677 = vadd.f32 0.0, %v676
      %v678 = vpop.f32.mrb[0].mxu0
      %679 = vmatprep.mubr.bf16.mxu0 0
      %680 = vmatmul.mubr.bf16.gmra.mrb[0].mxu0 %v561
      %v681 = vpop.f32.mrb[0].mxu0
      %v682 = vadd.f32 0.0, %v681
      %v683 = vpop.f32.mrb[0].mxu0
      %v684 = vpop.f32.mrb[0].mxu0
      %v685 = vadd.f32 0.0, %v684
      %v686 = vpop.f32.mrb[0].mxu0
      %687 = vmatprep.mubr.bf16.mxu0 0
      %688 = vmatmul.mubr.bf16.gmra.mrb[0].mxu0 %v562
      %v689 = vpop.f32.mrb[0].mxu0
      %v690 = vadd.f32 0.0, %v689
      %v691 = vpop.f32.mrb[0].mxu0
      %v692 = vpop.f32.mrb[0].mxu0
      %v693 = vadd.f32 0.0, %v692
      %v694 = vpop.f32.mrb[0].mxu0
      %695 = vmatprep.mubr.bf16.mxu0 0
      %696 = vmatmul.mubr.bf16.gmra.mrb[0].mxu0 %v563
      %v697 = vpop.f32.mrb[0].mxu0
      %v698 = vadd.f32 0.0, %v697
      %v699 = vpop.f32.mrb[0].mxu0
      %v700 = vpop.f32.mrb[0].mxu0
      %v701 = vadd.f32 0.0, %v700
      %v702 = vpop.f32.mrb[0].mxu0
      %703 = vmatprep.mubr.bf16.mxu0 0
      %704 = vmatmul.mubr.bf16.gmra.mrb[0].mxu0 %v564
      %v705 = vpop.f32.mrb[0].mxu0
      %v706 = vadd.f32 0.0, %v705
      %v707 = vpop.f32.mrb[0].mxu0
      %v708 = vpop.f32.mrb[0].mxu0
      %v709 = vadd.f32 0.0, %v708
      %v710 = vpop.f32.mrb[0].mxu0
      %711 = vmatprep.mubr.bf16.mxu0 0
      %712 = vmatmul.mubr.bf16.gmra.mrb[0].mxu0 %v565
      %v713 = vpop.f32.mrb[0].mxu0
      %v714 = vadd.f32 0.0, %v713
      %v715 = vpop.f32.mrb[0].mxu0
      %v716 = vpop.f32.mrb[0].mxu0
      %v717 = vadd.f32 0.0, %v716
      %v718 = vpop.f32.mrb[0].mxu0
      %719 = vmatprep.mubr.bf16.mxu0 0
      %720 = vmatmul.mubr.bf16.gmra.mrb[0].mxu0 %v566
      %v721 = vpop.f32.mrb[0].mxu0
      %v722 = vadd.f32 0.0, %v721
      %v723 = vpop.f32.mrb[0].mxu0
      %v724 = vpop.f32.mrb[0].mxu0
      %v725 = vadd.f32 0.0, %v724
      %v726 = vpop.f32.mrb[0].mxu0
      %727 = vdwg.mxu0
      %v728 = vld [vmem:[%s4] sm:$0x1]
      %v730 = vlaneseq
      %v731 = vshrl.u32 %v730, 7
      %v732 = vsub.s32 0, %v731
      %v733 = vrot.slane %v728, %v732
      %v735 = vmul.f32 %v666, %v733
      %v736 = vmul.f32 %v669, %v733
      %v737 = vmul.f32 %v674, %v733
      %v738 = vmul.f32 %v677, %v733
      %v739 = vmul.f32 %v682, %v733
      %v740 = vmul.f32 %v685, %v733
      %v741 = vmul.f32 %v690, %v733
      %v742 = vmul.f32 %v693, %v733
      %v743 = vmul.f32 %v698, %v733
      %v744 = vmul.f32 %v701, %v733
      %v745 = vmul.f32 %v706, %v733
      %v746 = vmul.f32 %v709, %v733
      %v747 = vmul.f32 %v714, %v733
      %v748 = vmul.f32 %v717, %v733
      %v749 = vmul.f32 %v722, %v733
      %v750 = vmul.f32 %v725, %v733
      %v751 = vld [vmem:[%s5] sm:$0x1]
      %v753 = vlaneseq
      %v754 = vshrl.u32 %v753, 7
      %v755 = vsub.s32 0, %v754
      %v756 = vrot.slane %v751, %v755
      %v758 = vadd.f32 %v735, %v756
      %v759 = vadd.f32 %v736, %v756
      %v760 = vadd.f32 %v737, %v756
      %v761 = vadd.f32 %v738, %v756
      %v762 = vadd.f32 %v739, %v756
      %v763 = vadd.f32 %v740, %v756
      %v764 = vadd.f32 %v741, %v756
      %v765 = vadd.f32 %v742, %v756
      %v766 = vadd.f32 %v743, %v756
      %v767 = vadd.f32 %v744, %v756
      %v768 = vadd.f32 %v745, %v756
      %v769 = vadd.f32 %v746, %v756
      %v770 = vadd.f32 %v747, %v756
      %v771 = vadd.f32 %v748, %v756
      %v772 = vadd.f32 %v749, %v756
      %v773 = vadd.f32 %v750, %v756
      %vm774 = vcmp.gt.f32.partialorder %v758, 0.0
      %vm775 = vcmp.gt.f32.partialorder %v759, 0.0
      %vm776 = vcmp.gt.f32.partialorder %v760, 0.0
      %vm777 = vcmp.gt.f32.partialorder %v761, 0.0
      %vm778 = vcmp.gt.f32.partialorder %v762, 0.0
      %vm779 = vcmp.gt.f32.partialorder %v763, 0.0
      %vm780 = vcmp.gt.f32.partialorder %v764, 0.0
      %vm781 = vcmp.gt.f32.partialorder %v765, 0.0
      %vm782 = vcmp.gt.f32.partialorder %v766, 0.0
      %vm783 = vcmp.gt.f32.partialorder %v767, 0.0
      %vm784 = vcmp.gt.f32.partialorder %v768, 0.0
      %vm785 = vcmp.gt.f32.partialorder %v769, 0.0
      %vm786 = vcmp.gt.f32.partialorder %v770, 0.0
      %vm787 = vcmp.gt.f32.partialorder %v771, 0.0
      %vm788 = vcmp.gt.f32.partialorder %v772, 0.0
      %vm789 = vcmp.gt.f32.partialorder %v773, 0.0
      %v790 = vmul.f32 %v758, 0.2
      %v791 = vmul.f32 %v759, 0.2
      %v792 = vmul.f32 %v760, 0.2
      %v793 = vmul.f32 %v761, 0.2
      %v794 = vmul.f32 %v762, 0.2
      %v795 = vmul.f32 %v763, 0.2
      %v796 = vmul.f32 %v764, 0.2
      %v797 = vmul.f32 %v765, 0.2
      %v798 = vmul.f32 %v766, 0.2
      %v799 = vmul.f32 %v767, 0.2
      %v800 = vmul.f32 %v768, 0.2
      %v801 = vmul.f32 %v769, 0.2
      %v802 = vmul.f32 %v770, 0.2
      %v803 = vmul.f32 %v771, 0.2
      %v804 = vmul.f32 %v772, 0.2
      %v805 = vmul.f32 %v773, 0.2
      %v806 = vsel %vm774, %v758, %v790
      %v807 = vsel %vm775, %v759, %v791
      %v808 = vsel %vm776, %v760, %v792
      %v809 = vsel %vm777, %v761, %v793
      %v810 = vsel %vm778, %v762, %v794
      %v811 = vsel %vm779, %v763, %v795
      %v812 = vsel %vm780, %v764, %v796
      %v813 = vsel %vm781, %v765, %v797
      %v814 = vsel %vm782, %v766, %v798
      %v815 = vsel %vm783, %v767, %v799
      %v816 = vsel %vm784, %v768, %v800
      %v817 = vsel %vm785, %v769, %v801
      %v818 = vsel %vm786, %v770, %v802
      %v819 = vsel %vm787, %v771, %v803
      %v820 = vsel %vm788, %v772, %v804
      %v821 = vsel %vm789, %v773, %v805
      %v822 = vpack.c.bf16 %v807, %v806
      %v823 = vpack.c.bf16 %v809, %v808
      %v824 = vpack.c.bf16 %v811, %v810
      %v825 = vpack.c.bf16 %v813, %v812
      %v826 = vpack.c.bf16 %v815, %v814
      %v827 = vpack.c.bf16 %v817, %v816
      %v828 = vpack.c.bf16 %v819, %v818
      %v829 = vpack.c.bf16 %v821, %v820
      %v830 = vld [vmem:[%s6] sm:$0xf]
      %v831 = vld [vmem:[%s6 + $0x4] sm:$0xf]
      %v832 = vld [vmem:[%s6 + $0x8] sm:$0xf]
      %v833 = vld [vmem:[%s6 + $0xc] sm:$0xf]
      %v834 = vld [vmem:[%s6 + $0x10] sm:$0xf]
      %v835 = vld [vmem:[%s6 + $0x14] sm:$0xf]
      %v836 = vld [vmem:[%s6 + $0x18] sm:$0xf]
      %v837 = vld [vmem:[%s6 + $0x1c] sm:$0xf]
      %v838 = vld [vmem:[%s7] sm:$0x1]
      %v840 = vlaneseq
      %v841 = vshrl.u32 %v840, 7
      %v842 = vsub.s32 0, %v841
      %v843 = vrot.slane %v838, %v842
      %v853 = vunpack.c.l.b16 %v830
      %v854 = vunpack.c.l.b16 %v831
      %v855 = vunpack.c.l.b16 %v832
      %v856 = vunpack.c.l.b16 %v833
      %v857 = vunpack.c.l.b16 %v834
      %v858 = vunpack.c.l.b16 %v835
      %v859 = vunpack.c.l.b16 %v836
      %v860 = vunpack.c.l.b16 %v837
      %v861 = vpack.c.b16 %v854, %v853
      %v862 = vpack.c.b16 %v856, %v855
      %v863 = vpack.c.b16 %v858, %v857
      %v864 = vpack.c.b16 %v860, %v859
      %vm869 = vcmask 523264
      %v871 = vsel %vm869, %v822, 0
      %v874 = vsel %vm869, %v823, 0
      %v877 = vsel %vm869, %v824, 0
      %v880 = vsel %vm869, %v825, 0
      %v883 = vsel %vm869, %v826, 0
      %v886 = vsel %vm869, %v827, 0
      %v889 = vsel %vm869, %v828, 0
      %v892 = vsel %vm869, %v829, 0
      %894 = vmatprep.subr.bf16.mxu0 0
      %895 = vmatpush1.bf16.msra.mxu0 %v861
      %896 = vmatprep.subr.bf16.mxu0 0
      %897 = vmatpush1.bf16.msra.mxu0 %v862
      %898 = vmatprep.subr.bf16.mxu0 0
      %899 = vmatpush1.bf16.msra.mxu0 %v863
      %900 = vmatprep.subr.bf16.mxu0 0
      %901 = vmatpush1.bf16.msra.mxu0 %v864
      %902 = vmatprep.subr.bf16.mxu0 0
      %903 = vmatpush1.bf16.msra.mxu0 0
      %904 = vmatprep.subr.bf16.mxu0 0
      %905 = vmatpush1.bf16.msra.mxu0 0
      %906 = vmatprep.subr.bf16.mxu0 0
      %907 = vmatpush1.bf16.msra.mxu0 0
      %908 = vmatprep.subr.bf16.mxu0 0
      %909 = vmatpush1.bf16.msra.mxu0 0
      %910 = vmatprep.subr.bf16.mxu0 0
      %911 = vmatpush1.bf16.msra.mxu0 0
      %912 = vmatprep.subr.bf16.mxu0 0
      %913 = vmatpush1.bf16.msra.mxu0 0
      %914 = vmatprep.subr.bf16.mxu0 0
      %915 = vmatpush1.bf16.msra.mxu0 0
      %916 = vmatprep.subr.bf16.mxu0 0
      %917 = vmatpush1.bf16.msra.mxu0 0
      %918 = vmatprep.subr.bf16.mxu0 0
      %919 = vmatpush1.bf16.msra.mxu0 0
      %920 = vmatprep.subr.bf16.mxu0 0
      %921 = vmatpush1.bf16.msra.mxu0 0
      %922 = vmatprep.subr.bf16.mxu0 0
      %923 = vmatpush1.bf16.msra.mxu0 0
      %924 = vmatprep.subr.bf16.mxu0 0
      %925 = vmatpush1.bf16.msra.mxu0 0
      %926 = vmatprep.mubr.bf16.mxu0 0
      %927 = vmatmul.mubr.bf16.gmra.mrb[0].mxu0 %v871
      %v928 = vpop.f32.mrb[0].mxu0
      %v929 = vadd.f32 %v843, %v928
      %v930 = vpop.f32.mrb[0].mxu0
      %v931 = vpop.f32.mrb[0].mxu0
      %v932 = vadd.f32 %v843, %v931
      %v933 = vpop.f32.mrb[0].mxu0
      %934 = vmatprep.mubr.bf16.mxu0 0
      %935 = vmatmul.mubr.bf16.gmra.mrb[0].mxu0 %v874
      %v936 = vpop.f32.mrb[0].mxu0
      %v937 = vadd.f32 %v843, %v936
      %v938 = vpop.f32.mrb[0].mxu0
      %v939 = vpop.f32.mrb[0].mxu0
      %v940 = vadd.f32 %v843, %v939
      %v941 = vpop.f32.mrb[0].mxu0
      %942 = vmatprep.mubr.bf16.mxu0 0
      %943 = vmatmul.mubr.bf16.gmra.mrb[0].mxu0 %v877
      %v944 = vpop.f32.mrb[0].mxu0
      %v945 = vadd.f32 %v843, %v944
      %v946 = vpop.f32.mrb[0].mxu0
      %v947 = vpop.f32.mrb[0].mxu0
      %v948 = vadd.f32 %v843, %v947
      %v949 = vpop.f32.mrb[0].mxu0
      %950 = vmatprep.mubr.bf16.mxu0 0
      %951 = vmatmul.mubr.bf16.gmra.mrb[0].mxu0 %v880
      %v952 = vpop.f32.mrb[0].mxu0
      %v953 = vadd.f32 %v843, %v952
      %v954 = vpop.f32.mrb[0].mxu0
      %v955 = vpop.f32.mrb[0].mxu0
      %v956 = vadd.f32 %v843, %v955
      %v957 = vpop.f32.mrb[0].mxu0
      %958 = vmatprep.mubr.bf16.mxu0 0
      %959 = vmatmul.mubr.bf16.gmra.mrb[0].mxu0 %v883
      %v960 = vpop.f32.mrb[0].mxu0
      %v961 = vadd.f32 %v843, %v960
      %v962 = vpop.f32.mrb[0].mxu0
      %v963 = vpop.f32.mrb[0].mxu0
      %v964 = vadd.f32 %v843, %v963
      %v965 = vpop.f32.mrb[0].mxu0
      %966 = vmatprep.mubr.bf16.mxu0 0
      %967 = vmatmul.mubr.bf16.gmra.mrb[0].mxu0 %v886
      %v968 = vpop.f32.mrb[0].mxu0
      %v969 = vadd.f32 %v843, %v968
      %v970 = vpop.f32.mrb[0].mxu0
      %v971 = vpop.f32.mrb[0].mxu0
      %v972 = vadd.f32 %v843, %v971
      %v973 = vpop.f32.mrb[0].mxu0
      %974 = vmatprep.mubr.bf16.mxu0 0
      %975 = vmatmul.mubr.bf16.gmra.mrb[0].mxu0 %v889
      %v976 = vpop.f32.mrb[0].mxu0
      %v977 = vadd.f32 %v843, %v976
      %v978 = vpop.f32.mrb[0].mxu0
      %v979 = vpop.f32.mrb[0].mxu0
      %v980 = vadd.f32 %v843, %v979
      %v981 = vpop.f32.mrb[0].mxu0
      %982 = vmatprep.mubr.bf16.mxu0 0
      %983 = vmatmul.mubr.bf16.gmra.mrb[0].mxu0 %v892
      %v984 = vpop.f32.mrb[0].mxu0
      %v985 = vadd.f32 %v843, %v984
      %v986 = vpop.f32.mrb[0].mxu0
      %v987 = vpop.f32.mrb[0].mxu0
      %v988 = vadd.f32 %v843, %v987
      %v989 = vpop.f32.mrb[0].mxu0
      %990 = vdwg.mxu0
      %v991 = vtanh.pop %v929
      %v992 = vtanh.pop %v932
      %v993 = vtanh.pop %v937
      %v994 = vtanh.pop %v940
      %v995 = vtanh.pop %v945
      %v996 = vtanh.pop %v948
      %v997 = vtanh.pop %v953
      %v998 = vtanh.pop %v956
      %v999 = vtanh.pop %v961
      %v1000 = vtanh.pop %v964
      %v1001 = vtanh.pop %v969
      %v1002 = vtanh.pop %v972
      %v1003 = vtanh.pop %v977
      %v1004 = vtanh.pop %v980
      %v1005 = vtanh.pop %v985
      %v1006 = vtanh.pop %v988
      %1007 = vst.msk [vmem:[%s307] sm:$0xff] %vm869, %v991
      %1008 = vst.msk [vmem:[%s307 + $0x8] sm:$0xff] %vm869, %v992
      %1009 = vst.msk [vmem:[%s307 + $0x10] sm:$0xff] %vm869, %v993
      %1010 = vst.msk [vmem:[%s307 + $0x18] sm:$0xff] %vm869, %v994
      %1011 = vst.msk [vmem:[%s307 + $0x20] sm:$0xff] %vm869, %v995
      %1012 = vst.msk [vmem:[%s307 + $0x28] sm:$0xff] %vm869, %v996
      %1013 = vst.msk [vmem:[%s307 + $0x30] sm:$0xff] %vm869, %v997
      %1014 = vst.msk [vmem:[%s307 + $0x38] sm:$0xff] %vm869, %v998
      %1015 = vst.msk [vmem:[%s307 + $0x40] sm:$0xff] %vm869, %v999
      %1016 = vst.msk [vmem:[%s307 + $0x48] sm:$0xff] %vm869, %v1000
      %1017 = vst.msk [vmem:[%s307 + $0x50] sm:$0xff] %vm869, %v1001
      %1018 = vst.msk [vmem:[%s307 + $0x58] sm:$0xff] %vm869, %v1002
      %1019 = vst.msk [vmem:[%s307 + $0x60] sm:$0xff] %vm869, %v1003
      %1020 = vst.msk [vmem:[%s307 + $0x68] sm:$0xff] %vm869, %v1004
      %1021 = vst.msk [vmem:[%s307 + $0x70] sm:$0xff] %vm869, %v1005
      %1022 = vst.msk [vmem:[%s307 + $0x78] sm:$0xff] %vm869, %v1006
      %s1023 = smul.u32 16, %s19
      %p1024 = scmp.lt.s32.totalorder %s1023, 31
      %s1025 = scalar_select %p1024, %s1023, 31
      %s1026 = smul.addr %s1025, 8
      %s1027 = scalar_lea.vmem %s8, %s1026
      // Predicated region
      $region53: #{tpu_custom_call.1} parent=51 // pred_check
        %p1028 = pneg %p210
      $region54: #{tpu_custom_call.1} parent=51 // pred_check_branch
        %1030 = sbr.rel (%p1028) target = $region56
      $region55: #{tpu_custom_call.1} parent=51 // pred_region
        %s1031 = smul.u32 16, %s19
      $region56: #{tpu_custom_call.1} parent=51 // pred_fallthru
        _
    $region52: #{tpu_custom_call.1} parent=5 // pred_fallthru
      _
    %p1032 = scmp.le.s32.totalorder 2, %s14
    // Predicated region
    $region57: #{tpu_custom_call.1} parent=5 // pred_check
      %p1033 = pneg %p1032
    $region58: #{tpu_custom_call.1} parent=5 // pred_check_branch
      %1035 = sbr.rel (%p1033) target = $region60
    $region59: #{tpu_custom_call.1} parent=5 // pred_region
      %s1036 = ssub.s32 %s14, 2
      // Predicated region
      $region61: #{tpu_custom_call.1} parent=59 // pred_check
        %p1037 = pneg %p216
      $region62: #{tpu_custom_call.1} parent=59 // pred_check_branch
        %1039 = sbr.rel (%p1037) target = $region64
      $region63: #{tpu_custom_call.1} parent=59 // pred_region
        %s1040 = smul.u32 16, %s20
        %p1041 = scmp.lt.s32.totalorder %s1040, 31
        %s1042 = scalar_select %p1041, %s1040, 31
        %s1043 = smul.addr %s1042, 8
        %s1044 = scalar_lea.vmem %s8, %s1043
      $region64: #{tpu_custom_call.1} parent=59 // pred_fallthru
        _
    $region60: #{tpu_custom_call.1} parent=5 // pred_fallthru
      _
  $region6: #{tpu_custom_call.1} parent=0 // loop_footer
    %s18 = sadd.s32 1, %s14
  $region7: #{tpu_custom_call.1} parent=0 // loop_footer_branch
    %13 = sbr.rel target = $region3
  $region8: #{tpu_custom_call.1} parent=0 // loop_exit
    _

</llo_original>
